<compile_context>
chip_gen: v7x
topology: tpu7x:2x2x1
jax: 0.10.0
libtpu: 0.0.40
codegen_flags: <defaults>
</compile_context>

<pallas_src>
import functools

import jax
import jax.numpy as jnp
from jax.experimental import pallas as pl
from jax.experimental.pallas import tpu as pltpu

HIDDEN_PAD = 128  # lane-aligned hidden width (>= 100)


def _discriminator_kernel(x_ref, w1_ref, b1_ref, w2_ref, b2_ref, w3t_ref,
                          b3_ref, o_ref, *, tanh_dtype):
    """One batch tile: o[0, :] = tanh(tanh(x@W1+b1)@W2+b2) @ W3 + b3 (lane-dense)."""
    x = x_ref[...]                                              # (TB, in) bf16

    # hidden layer 1: bias add in f32, activation in tanh_dtype, emits bf16 operand.
    h = jnp.tanh(
        (jnp.dot(x, w1_ref[...], preferred_element_type=jnp.float32)
         + b1_ref[...]).astype(tanh_dtype)
    ).astype(jnp.bfloat16)

    # hidden layer 2
    h = jnp.tanh(
        (jnp.dot(h, w2_ref[...], preferred_element_type=jnp.float32)
         + b2_ref[...]).astype(tanh_dtype)
    ).astype(jnp.bfloat16)

    # logit head, lane-dense: (1, H) contracted with (TB, H) on H -> (1, TB)
    logit = jax.lax.dot_general(
        w3t_ref[...], h,
        dimension_numbers=(((1,), (1,)), ((), ())),
        preferred_element_type=jnp.float32)
    o_ref[...] = logit + b3_ref[0]


def _default_tanh_dtype():
    # bf16 EUP/VPU exist on v6e/v7x; keep f32 tanh elsewhere (v5e has no bf16 EUP).
    try:
        kind = jax.devices()[0].device_kind.lower()
    except Exception:
        return jnp.float32
    return jnp.bfloat16 if ("v6" in kind or "v7" in kind) else jnp.float32


def discriminator_forward(x, packed_params, *, block_b=1024, tanh_dtype=None):
    """x: (B, num_inputs).  packed_params from pack_params().  Returns (B, 1) f32."""
    w1, b1, w2, b2, w3t, b3 = packed_params
    B, num_inputs = x.shape
    if tanh_dtype is None:
        tanh_dtype = _default_tanh_dtype()

    n_tiles = pl.cdiv(B, block_b)
    assert n_tiles == 1 or block_b % 128 == 0, "block_b must be a multiple of 128"
    b_pad = n_tiles * block_b

    # x is the only HBM traffic that scales with B: feed it in bf16.
    if x.dtype != jnp.bfloat16:
        x = x.astype(jnp.bfloat16)

    resident = lambda i: (0, 0)       # weights/biases: same block every grid step

    hidden = w1.shape[1]
    cost = pl.CostEstimate(
        flops=2 * B * (num_inputs * hidden + hidden * hidden + hidden),
        transcendentals=2 * B * hidden,
        bytes_accessed=int(
            B * num_inputs * 2 + b_pad * 4
            + sum(int(a.size) * a.dtype.itemsize
                  for a in (w1, b1, w2, b2, w3t, b3))),
    )

    out = pl.pallas_call(
        functools.partial(_discriminator_kernel, tanh_dtype=tanh_dtype),
        out_shape=jax.ShapeDtypeStruct((1, b_pad), jnp.float32),
        grid=(n_tiles,),
        in_specs=[
            pl.BlockSpec((block_b, num_inputs), lambda i: (i, 0)),   # x batch tile
            pl.BlockSpec(w1.shape, resident),
            pl.BlockSpec(b1.shape, resident),
            pl.BlockSpec(w2.shape, resident),
            pl.BlockSpec(b2.shape, resident),
            pl.BlockSpec(w3t.shape, resident),
            pl.BlockSpec(memory_space=pltpu.MemorySpace.SMEM),       # b3 scalar
        ],
        out_specs=pl.BlockSpec((1, block_b), lambda i: (0, i)),      # lane-dense row
        compiler_params=pltpu.CompilerParams(
            dimension_semantics=("parallel",)),
        cost_estimate=cost,
    )(x, w1, b1, w2, b2, w3t, b3)

    return out.reshape(b_pad, 1)[:B]


def init_params_f32(key, num_inputs, hidden_size=(100, 100)):
    """f32 'PyTorch-layout' params: W (in, out), b (1, out); U(-1/sqrt(fan_in), .)."""
    params = []
    last_dim = num_inputs
    for nh in list(hidden_size) + [1]:
        key, kw, kb = jax.random.split(key, 3)
        bound = 1.0 / float(last_dim) ** 0.5
        w = jax.random.uniform(kw, (last_dim, nh), jnp.float32, -bound, bound)
        b = jax.random.uniform(kb, (1, nh), jnp.float32, -bound, bound)
        params += [w, b]
        last_dim = nh
    return tuple(params)


def pack_params(params_f32, hidden_pad=HIDDEN_PAD, weight_dtype=jnp.bfloat16):
    """Zero-pad hidden dims to hidden_pad, bf16 weights, f32 biases, W3 transposed."""
    w1, b1, w2, b2, w3, b3 = params_f32
    in_dim, h1 = w1.shape
    h2 = w2.shape[1]
    assert h1 <= hidden_pad and h2 <= hidden_pad

    w1p = jnp.zeros((in_dim, hidden_pad), weight_dtype).at[:, :h1].set(
        w1.astype(weight_dtype))
    b1p = jnp.zeros((1, hidden_pad), jnp.float32).at[:, :h1].set(b1)
    w2p = jnp.zeros((hidden_pad, hidden_pad), weight_dtype).at[:h1, :h2].set(
        w2.astype(weight_dtype))
    b2p = jnp.zeros((1, hidden_pad), jnp.float32).at[:, :h2].set(b2)
    # W3 packed transposed -> (1, hidden_pad) so the head result is lane-dense.
    w3tp = jnp.zeros((1, hidden_pad), weight_dtype).at[:, :h2].set(
        w3.T.astype(weight_dtype))
    b3p = b3.reshape((1,)).astype(jnp.float32)                 # scalar, lives in SMEM
    return (w1p, b1p, w2p, b2p, w3tp, b3p)


def reference_forward_packed(x, packed_params, tanh_dtype=jnp.float32):
    """Same precision recipe as the kernel (bf16 operands, f32 accumulate)."""
    w1, b1, w2, b2, w3t, b3 = packed_params
    h = x.astype(jnp.bfloat16)
    h = jnp.tanh((jnp.dot(h, w1, preferred_element_type=jnp.float32)
                  + b1).astype(tanh_dtype)).astype(jnp.bfloat16)
    h = jnp.tanh((jnp.dot(h, w2, preferred_element_type=jnp.float32)
                  + b2).astype(tanh_dtype)).astype(jnp.bfloat16)
    return jnp.dot(h, w3t.T, preferred_element_type=jnp.float32) + b3[0]


def reference_forward_f32(x, params_f32):
    """Pure-f32 reference of the original module (semantics sanity check)."""
    w1, b1, w2, b2, w3, b3 = params_f32
    h = jnp.tanh(x @ w1 + b1)
    h = jnp.tanh(h @ w2 + b2)
    return h @ w3 + b3


if __name__ == "__main__":
    batch = 512                 # 2 batch tiles at block_b=256 -> both v7x TCs busy
    num_inputs = 32
    hidden_size = (100, 100)    # module default

    key = jax.random.PRNGKey(0)
    key, kx = jax.random.split(key)
    x = jax.random.normal(kx, (batch, num_inputs), jnp.float32)

    params_f32 = init_params_f32(key, num_inputs, hidden_size)
    packed = pack_params(params_f32)

    tanh_dtype = _default_tanh_dtype()
    logits = discriminator_forward(x, packed, block_b=256, tanh_dtype=tanh_dtype)
    logits = jax.block_until_ready(logits)
    assert logits.shape == (batch, 1), logits.shape

    # Exact-recipe reference (bf16 weights/operands, f32 accumulate, same tanh dtype).
    expected = reference_forward_packed(x, packed, tanh_dtype=tanh_dtype)
    err = jnp.max(jnp.abs(logits - expected))
    assert jnp.allclose(logits, expected, atol=2e-2, rtol=2e-2), err

    # Sanity vs. the original f32 module math (bf16 weights approximation).
    expected_f32 = reference_forward_f32(x, params_f32)
    err_f32 = jnp.max(jnp.abs(logits - expected_f32))
    assert jnp.allclose(logits, expected_f32, atol=6e-2, rtol=6e-2), err_f32

    # Ragged batch (B not a multiple of block_b): partial last tile, no jnp.pad copy.
    logits_ragged = jax.block_until_ready(
        discriminator_forward(x[:200], packed, block_b=128, tanh_dtype=tanh_dtype))
    assert logits_ragged.shape == (200, 1), logits_ragged.shape
    err_r = jnp.max(jnp.abs(logits_ragged - expected[:200]))
    assert jnp.allclose(logits_ragged, expected[:200], atol=2e-2, rtol=2e-2), err_r

    print("KERNEL_OK")
</pallas_src>

<mosaic_0001>
module attributes {stable_mosaic.version = 11 : i64} {
  func.func @_discriminator_kernel(%arg0: i32, %arg1: memref<256x32xbf16, #tpu.memory_space<vmem>>, %arg2: memref<32x128xbf16, #tpu.memory_space<vmem>>, %arg3: memref<1x128xf32, #tpu.memory_space<vmem>>, %arg4: memref<128x128xbf16, #tpu.memory_space<vmem>>, %arg5: memref<1x128xf32, #tpu.memory_space<vmem>>, %arg6: memref<1x128xbf16, #tpu.memory_space<vmem>>, %arg7: memref<1xf32, #tpu.memory_space<smem>>, %arg8: memref<1x256xf32, #tpu.memory_space<vmem>>) attributes {dimension_semantics = [#tpu.dimension_semantics<parallel>], iteration_bounds = array<i64: 2>, scalar_prefetch = 0 : i64, scratch_operands = 0 : i64, tpu.core_type = #tpu.core_type<tc>, window_params = [{transform_indices = @transform_0, window_bounds = array<i64: 256, 32>}, {pipeline_mode = #tpu.pipeline_mode<synchronous>, transform_indices = @transform_1, window_bounds = array<i64: 32, 128>}, {pipeline_mode = #tpu.pipeline_mode<synchronous>, transform_indices = @transform_2, window_bounds = array<i64: 1, 128>}, {pipeline_mode = #tpu.pipeline_mode<synchronous>, transform_indices = @transform_3, window_bounds = array<i64: 128, 128>}, {pipeline_mode = #tpu.pipeline_mode<synchronous>, transform_indices = @transform_4, window_bounds = array<i64: 1, 128>}, {pipeline_mode = #tpu.pipeline_mode<synchronous>, transform_indices = @transform_5, window_bounds = array<i64: 1, 128>}, {transform_indices = @transform_6, window_bounds = array<i64: 1>}, {transform_indices = @transform_7, window_bounds = array<i64: 1, 256>}]} {
    %c0 = arith.constant 0 : index
    %c0_0 = arith.constant 0 : index
    %0 = vector.load %arg1[%c0, %c0_0] : memref<256x32xbf16, #tpu.memory_space<vmem>>, vector<256x32xbf16>
    %c0_1 = arith.constant 0 : index
    %c0_2 = arith.constant 0 : index
    %1 = vector.load %arg2[%c0_1, %c0_2] : memref<32x128xbf16, #tpu.memory_space<vmem>>, vector<32x128xbf16>
    %cst = arith.constant dense<0.000000e+00> : vector<256x128xf32>
    %2 = tpu.matmul %0, %1, %cst {dimension_numbers = #tpu.dot_dimension_numbers<[1], [0], [0], [1], [0, 0, 1, 1], [], []>} : vector<256x32xbf16>, vector<32x128xbf16>, vector<256x128xf32> -> vector<256x128xf32>
    %c0_3 = arith.constant 0 : index
    %c0_4 = arith.constant 0 : index
    %3 = vector.load %arg3[%c0_3, %c0_4] : memref<1x128xf32, #tpu.memory_space<vmem>>, vector<1x128xf32>
    %4 = vector.broadcast %3 : vector<1x128xf32> to vector<256x128xf32>
    %5 = arith.addf %2, %4 : vector<256x128xf32>
    %6 = math.tanh %5 : vector<256x128xf32>
    %7 = arith.truncf %6 : vector<256x128xf32> to vector<256x128xbf16>
    %c0_5 = arith.constant 0 : index
    %c0_6 = arith.constant 0 : index
    %8 = vector.load %arg4[%c0_5, %c0_6] : memref<128x128xbf16, #tpu.memory_space<vmem>>, vector<128x128xbf16>
    %cst_7 = arith.constant dense<0.000000e+00> : vector<256x128xf32>
    %9 = tpu.matmul %7, %8, %cst_7 {dimension_numbers = #tpu.dot_dimension_numbers<[1], [0], [0], [1], [0, 0, 1, 1], [], []>} : vector<256x128xbf16>, vector<128x128xbf16>, vector<256x128xf32> -> vector<256x128xf32>
    %c0_8 = arith.constant 0 : index
    %c0_9 = arith.constant 0 : index
    %10 = vector.load %arg5[%c0_8, %c0_9] : memref<1x128xf32, #tpu.memory_space<vmem>>, vector<1x128xf32>
    %11 = vector.broadcast %10 : vector<1x128xf32> to vector<256x128xf32>
    %12 = arith.addf %9, %11 : vector<256x128xf32>
    %13 = math.tanh %12 : vector<256x128xf32>
    %14 = arith.truncf %13 : vector<256x128xf32> to vector<256x128xbf16>
    %c0_10 = arith.constant 0 : index
    %c0_11 = arith.constant 0 : index
    %15 = vector.load %arg6[%c0_10, %c0_11] : memref<1x128xbf16, #tpu.memory_space<vmem>>, vector<1x128xbf16>
    %cst_12 = arith.constant dense<0.000000e+00> : vector<1x256xf32>
    %16 = tpu.matmul %15, %14, %cst_12 {dimension_numbers = #tpu.dot_dimension_numbers<[1], [1], [0], [0], [0, 0, 1, 0], [], []>} : vector<1x128xbf16>, vector<256x128xbf16>, vector<1x256xf32> -> vector<1x256xf32>
    %c0_13 = arith.constant 0 : index
    %17 = memref.load %arg7[%c0_13] : memref<1xf32, #tpu.memory_space<smem>>
    %18 = vector.broadcast %17 : f32 to vector<1x256xf32>
    %19 = arith.addf %16, %18 : vector<1x256xf32>
    %c0_14 = arith.constant 0 : index
    %c0_15 = arith.constant 0 : index
    %20 = vector.load %arg8[%c0_14, %c0_15] : memref<1x256xf32, #tpu.memory_space<vmem>>, vector<1x256xf32>
    tpu.vector_store %arg8[%c0_14, %c0_15], %19 {strides = array<i32>} : memref<1x256xf32, #tpu.memory_space<vmem>>, vector<1x256xf32>,
    return
  }
  func.func @transform_0(%arg0: i32) -> (i32, i32) {
    %c0_i32 = arith.constant 0 : i32
    %c0_i32_0 = arith.constant 0 : i32
    return %arg0, %c0_i32 : i32, i32
  }
  func.func @transform_1(%arg0: i32) -> (i32, i32) {
    %c0_i32 = arith.constant 0 : i32
    %c0_i32_0 = arith.constant 0 : i32
    %c0_i32_1 = arith.constant 0 : i32
    return %c0_i32, %c0_i32_0 : i32, i32
  }
  func.func @transform_2(%arg0: i32) -> (i32, i32) {
    %c0_i32 = arith.constant 0 : i32
    %c0_i32_0 = arith.constant 0 : i32
    %c0_i32_1 = arith.constant 0 : i32
    return %c0_i32, %c0_i32_0 : i32, i32
  }
  func.func @transform_3(%arg0: i32) -> (i32, i32) {
    %c0_i32 = arith.constant 0 : i32
    %c0_i32_0 = arith.constant 0 : i32
    %c0_i32_1 = arith.constant 0 : i32
    return %c0_i32, %c0_i32_0 : i32, i32
  }
  func.func @transform_4(%arg0: i32) -> (i32, i32) {
    %c0_i32 = arith.constant 0 : i32
    %c0_i32_0 = arith.constant 0 : i32
    %c0_i32_1 = arith.constant 0 : i32
    return %c0_i32, %c0_i32_0 : i32, i32
  }
  func.func @transform_5(%arg0: i32) -> (i32, i32) {
    %c0_i32 = arith.constant 0 : i32
    %c0_i32_0 = arith.constant 0 : i32
    %c0_i32_1 = arith.constant 0 : i32
    return %c0_i32, %c0_i32_0 : i32, i32
  }
  func.func @transform_6(%arg0: i32) -> i32 {
    %c0_i32 = arith.constant 0 : i32
    %c0_i32_0 = arith.constant 0 : i32
    return %c0_i32 : i32
  }
  func.func @transform_7(%arg0: i32) -> (i32, i32) {
    %c0_i32 = arith.constant 0 : i32
    %c0_i32_0 = arith.constant 0 : i32
    return %c0_i32, %arg0 : i32, i32
  }
}

</mosaic_0001>

<llo_original>
// kernel: tpu_custom_call.1
$region0: #{tpu_custom_call.1}
  #allocation0 [shape = 'u32[]', space=smem, size = 0x4, offset = 0x4, fixed_abs, tag = 'smem constant byte address 0x4 - core index']
  #allocation1 [shape = 'u32[144,128]{1,0:T(1,128)}', space=vmem, size = 0x12000, scoped, tag = 'internal scratch']
  #allocation2 [shape = 'f32[1]{0:T(128)S(6)}', space=smem, size = 0x200, scoped, tag = 'scoped memory for tpu_custom_call.1']
  %s0 = inlined_call_operand.vmem [shape: bf16[512,32], index: 0, kind: input, shape index: {}]
  %s1 = inlined_call_operand.vmem [shape: bf16[32,128], index: 1, kind: input, shape index: {}]
  %s2 = inlined_call_operand.vmem [shape: f32[1,128], index: 2, kind: input, shape index: {}]
  %s3 = inlined_call_operand.vmem [shape: bf16[128,128], index: 3, kind: input, shape index: {}]
  %s4 = inlined_call_operand.vmem [shape: f32[1,128], index: 4, kind: input, shape index: {}]
  %s5 = inlined_call_operand.vmem [shape: bf16[1,128], index: 5, kind: input, shape index: {}]
  %s6 = inlined_call_operand.<no memory space> [shape: f32[1], index: 6, kind: input, shape index: {}]
  %s7 = inlined_call_operand.hbm [shape: f32[1,512], index: 7, kind: output, shape index: {}]
  %s8 = sld [smem:[#allocation0]]
  $region61: #{tpu_custom_call.1} parent=0
    _
  %s10 = ssub.s32 1, %s8
  %s11 = scalar_select 0, %s10, %s8
  %12 = sst [smem:[#allocation2]] %s6
  $region1: #{tpu_custom_call.1} parent=0
    #allocation3 [shape = 'u8[2048]{0}', space=vmem, size = 0x800, scoped, tag = 'output window, operand 0']
    #allocation4 [shape = 's32[2]{0}', space=sflag, size = 0x8, scoped, tag = 'scoped memory for tpu_custom_call.1']
    %13 = vsyncpa [#allocation4], 0
    %s14 = scalar_lea.sflag [#allocation4], 1
    %15 = vsyncpa %s14, 0
    loop: start=0, step=1, limit=4
    $region2: #{tpu_custom_call.1} parent=1 // loop_pre_header
      _
    $region3: #{tpu_custom_call.1} parent=1 // loop_header
      %s17 = sphi 0, %s21
      %p18 = scmp.ge.s32.totalorder %s17, 4
      %s27 = sphi 0, %s29
      %s30 = sphi 0, %s27
      %s31 = sphi 0, %s30
      %s47 = sphi 0, %s31
      %s51 = sphi 0, %s51
      %s53 = sphi 0, %s51
      %s54 = sphi 0, %s53
      %s68 = sphi 0, %s54
      %s72 = sphi 0, %s72
      %s74 = sphi 0, %s72
      %s75 = sphi 0, %s74
      %s89 = sphi 0, %s75
      %s93 = sphi 0, %s93
      %s95 = sphi 0, %s93
      %s96 = sphi 0, %s95
      %s110 = sphi 0, %s96
      %s114 = sphi 0, %s114
      %s116 = sphi 0, %s114
      %s117 = sphi 0, %s116
      %s131 = sphi 0, %s117
      %s135 = sphi 0, %s135
      %s137 = sphi 0, %s135
      %s138 = sphi 0, %s137
      %s152 = sphi 0, %s138
      %s156 = sphi 0, %s156
      %s158 = sphi 0, %s156
      %s159 = sphi 0, %s158
      %s173 = sphi 0, %s159
      %s179 = sphi 0, %s181
      %s182 = sphi 0, %s179
      %s183 = sphi 0, %s182
      %s199 = sphi 0, %s183
    $region4: #{tpu_custom_call.1} parent=1 // loop_header_branch
      %20 = sbr.rel (%p18) target = $region8
    $region5: #{tpu_custom_call.1} parent=1 // loop_body
      %s22 = ssub.s32 %s17, 1
      %s23 = ssub.s32 %s17, 2
      %s24 = sadd.s32 %s17, 1
      %s25 = ssub.s32 %s17, %s24
      %p26 = scmp.eq.s32.totalorder %s25, 0
      %s28 = sadd.s32 %s27, 1
      %s29 = scalar_select %p26, %s27, %s28
      %p32 = pneg %p26
      %p33 = scmp.eq.s32.totalorder %s17, 1
      %p34 = por %p32, %p33
      %p35 = scmp.ne.s32.totalorder %s27, %s30
      %p36 = scmp.eq.s32.totalorder %s17, 0
      %p37 = por %p35, %p36
      %p38 = scmp.ne.s32.totalorder %s27, %s30
      %p39 = scmp.eq.s32.totalorder %s22, 1
      %p40 = por %p38, %p39
      %p41 = scmp.ne.s32.totalorder %s30, %s31
      %p42 = scmp.eq.s32.totalorder %s22, 0
      %p43 = por %p41, %p42
      %p44 = scmp.ne.s32.totalorder %s30, %s31
      %p45 = scmp.eq.s32.totalorder %s23, 1
      %p46 = por %p44, %p45
      %p48 = scmp.ne.s32.totalorder %s31, %s47
      %p49 = scmp.eq.s32.totalorder %s23, 0
      %p50 = por %p48, %p49
      %s52 = sadd.s32 %s51, 1
      %p55 = scmp.eq.s32.totalorder %s17, 1
      %p56 = scmp.ne.s32.totalorder %s51, %s53
      %p57 = scmp.eq.s32.totalorder %s17, 0
      %p58 = por %p56, %p57
      %p59 = scmp.ne.s32.totalorder %s51, %s53
      %p60 = scmp.eq.s32.totalorder %s22, 1
      %p61 = por %p59, %p60
      %p62 = scmp.ne.s32.totalorder %s53, %s54
      %p63 = scmp.eq.s32.totalorder %s22, 0
      %p64 = por %p62, %p63
      %p65 = scmp.ne.s32.totalorder %s53, %s54
      %p66 = scmp.eq.s32.totalorder %s23, 1
      %p67 = por %p65, %p66
      %p69 = scmp.ne.s32.totalorder %s54, %s68
      %p70 = scmp.eq.s32.totalorder %s23, 0
      %p71 = por %p69, %p70
      %s73 = sadd.s32 %s72, 1
      %p76 = scmp.eq.s32.totalorder %s17, 1
      %p77 = scmp.ne.s32.totalorder %s72, %s74
      %p78 = scmp.eq.s32.totalorder %s17, 0
      %p79 = por %p77, %p78
      %p80 = scmp.ne.s32.totalorder %s72, %s74
      %p81 = scmp.eq.s32.totalorder %s22, 1
      %p82 = por %p80, %p81
      %p83 = scmp.ne.s32.totalorder %s74, %s75
      %p84 = scmp.eq.s32.totalorder %s22, 0
      %p85 = por %p83, %p84
      %p86 = scmp.ne.s32.totalorder %s74, %s75
      %p87 = scmp.eq.s32.totalorder %s23, 1
      %p88 = por %p86, %p87
      %p90 = scmp.ne.s32.totalorder %s75, %s89
      %p91 = scmp.eq.s32.totalorder %s23, 0
      %p92 = por %p90, %p91
      %s94 = sadd.s32 %s93, 1
      %p97 = scmp.eq.s32.totalorder %s17, 1
      %p98 = scmp.ne.s32.totalorder %s93, %s95
      %p99 = scmp.eq.s32.totalorder %s17, 0
      %p100 = por %p98, %p99
      %p101 = scmp.ne.s32.totalorder %s93, %s95
      %p102 = scmp.eq.s32.totalorder %s22, 1
      %p103 = por %p101, %p102
      %p104 = scmp.ne.s32.totalorder %s95, %s96
      %p105 = scmp.eq.s32.totalorder %s22, 0
      %p106 = por %p104, %p105
      %p107 = scmp.ne.s32.totalorder %s95, %s96
      %p108 = scmp.eq.s32.totalorder %s23, 1
      %p109 = por %p107, %p108
      %p111 = scmp.ne.s32.totalorder %s96, %s110
      %p112 = scmp.eq.s32.totalorder %s23, 0
      %p113 = por %p111, %p112
      %s115 = sadd.s32 %s114, 1
      %p118 = scmp.eq.s32.totalorder %s17, 1
      %p119 = scmp.ne.s32.totalorder %s114, %s116
      %p120 = scmp.eq.s32.totalorder %s17, 0
      %p121 = por %p119, %p120
      %p122 = scmp.ne.s32.totalorder %s114, %s116
      %p123 = scmp.eq.s32.totalorder %s22, 1
      %p124 = por %p122, %p123
      %p125 = scmp.ne.s32.totalorder %s116, %s117
      %p126 = scmp.eq.s32.totalorder %s22, 0
      %p127 = por %p125, %p126
      %p128 = scmp.ne.s32.totalorder %s116, %s117
      %p129 = scmp.eq.s32.totalorder %s23, 1
      %p130 = por %p128, %p129
      %p132 = scmp.ne.s32.totalorder %s117, %s131
      %p133 = scmp.eq.s32.totalorder %s23, 0
      %p134 = por %p132, %p133
      %s136 = sadd.s32 %s135, 1
      %p139 = scmp.eq.s32.totalorder %s17, 1
      %p140 = scmp.ne.s32.totalorder %s135, %s137
      %p141 = scmp.eq.s32.totalorder %s17, 0
      %p142 = por %p140, %p141
      %p143 = scmp.ne.s32.totalorder %s135, %s137
      %p144 = scmp.eq.s32.totalorder %s22, 1
      %p145 = por %p143, %p144
      %p146 = scmp.ne.s32.totalorder %s137, %s138
      %p147 = scmp.eq.s32.totalorder %s22, 0
      %p148 = por %p146, %p147
      %p149 = scmp.ne.s32.totalorder %s137, %s138
      %p150 = scmp.eq.s32.totalorder %s23, 1
      %p151 = por %p149, %p150
      %p153 = scmp.ne.s32.totalorder %s138, %s152
      %p154 = scmp.eq.s32.totalorder %s23, 0
      %p155 = por %p153, %p154
      %s157 = sadd.s32 %s156, 1
      %p160 = scmp.eq.s32.totalorder %s17, 1
      %p161 = scmp.ne.s32.totalorder %s156, %s158
      %p162 = scmp.eq.s32.totalorder %s17, 0
      %p163 = por %p161, %p162
      %p164 = scmp.ne.s32.totalorder %s156, %s158
      %p165 = scmp.eq.s32.totalorder %s22, 1
      %p166 = por %p164, %p165
      %p167 = scmp.ne.s32.totalorder %s158, %s159
      %p168 = scmp.eq.s32.totalorder %s22, 0
      %p169 = por %p167, %p168
      %p170 = scmp.ne.s32.totalorder %s158, %s159
      %p171 = scmp.eq.s32.totalorder %s23, 1
      %p172 = por %p170, %p171
      %p174 = scmp.ne.s32.totalorder %s159, %s173
      %p175 = scmp.eq.s32.totalorder %s23, 0
      %p176 = por %p174, %p175
      %s177 = ssub.s32 %s17, %s24
      %p178 = scmp.eq.s32.totalorder %s177, 0
      %s180 = sadd.s32 %s179, 1
      %s181 = scalar_select %p178, %s179, %s180
      %p184 = pneg %p178
      %p185 = scmp.eq.s32.totalorder %s17, 1
      %p186 = por %p184, %p185
      %p187 = scmp.ne.s32.totalorder %s179, %s182
      %p188 = scmp.eq.s32.totalorder %s17, 0
      %p189 = por %p187, %p188
      %p190 = scmp.ne.s32.totalorder %s179, %s182
      %p191 = scmp.eq.s32.totalorder %s22, 1
      %p192 = por %p190, %p191
      %p193 = scmp.ne.s32.totalorder %s182, %s183
      %p194 = scmp.eq.s32.totalorder %s22, 0
      %p195 = por %p193, %p194
      %p196 = scmp.ne.s32.totalorder %s182, %s183
      %p197 = scmp.eq.s32.totalorder %s23, 1
      %p198 = por %p196, %p197
      %p200 = scmp.ne.s32.totalorder %s183, %s199
      %p201 = scmp.eq.s32.totalorder %s23, 0
      %p202 = por %p200, %p201
      %p203 = scmp.le.s32.totalorder 1, %s17
      %p204 = scmp.lt.s32.totalorder %s17, 3
      %p205 = pnand %p203, %p204
      %p206 = pneg %p205
      // Predicated region
      $region9: #{tpu_custom_call.1} parent=5 // pred_check
        _
      $region10: #{tpu_custom_call.1} parent=5 // pred_check_branch
        %208 = sbr.rel (%p205) target = $region12
      $region11: #{tpu_custom_call.1} parent=5 // pred_region
        %s209 = ssub.s32 %s17, 1
        // Predicated region
        $region13: #{tpu_custom_call.1} parent=11 // pred_check
          %p210 = pneg %p64
        $region14: #{tpu_custom_call.1} parent=11 // pred_check_branch
          %212 = sbr.rel (%p210) target = $region16
        $region15: #{tpu_custom_call.1} parent=11 // pred_region
          _
        $region16: #{tpu_custom_call.1} parent=11 // pred_fallthru
          _
        // Predicated region
        $region17: #{tpu_custom_call.1} parent=11 // pred_check
          %p213 = pneg %p85
        $region18: #{tpu_custom_call.1} parent=11 // pred_check_branch
          %215 = sbr.rel (%p213) target = $region20
        $region19: #{tpu_custom_call.1} parent=11 // pred_region
          _
        $region20: #{tpu_custom_call.1} parent=11 // pred_fallthru
          _
        // Predicated region
        $region21: #{tpu_custom_call.1} parent=11 // pred_check
          %p216 = pneg %p106
        $region22: #{tpu_custom_call.1} parent=11 // pred_check_branch
          %218 = sbr.rel (%p216) target = $region24
        $region23: #{tpu_custom_call.1} parent=11 // pred_region
          _
        $region24: #{tpu_custom_call.1} parent=11 // pred_fallthru
          _
        // Predicated region
        $region25: #{tpu_custom_call.1} parent=11 // pred_check
          %p219 = pneg %p127
        $region26: #{tpu_custom_call.1} parent=11 // pred_check_branch
          %221 = sbr.rel (%p219) target = $region28
        $region27: #{tpu_custom_call.1} parent=11 // pred_region
          _
        $region28: #{tpu_custom_call.1} parent=11 // pred_fallthru
          _
        // Predicated region
        $region29: #{tpu_custom_call.1} parent=11 // pred_check
          %p222 = pneg %p148
        $region30: #{tpu_custom_call.1} parent=11 // pred_check_branch
          %224 = sbr.rel (%p222) target = $region32
        $region31: #{tpu_custom_call.1} parent=11 // pred_region
          _
        $region32: #{tpu_custom_call.1} parent=11 // pred_fallthru
          _
        // Predicated region
        $region33: #{tpu_custom_call.1} parent=11 // pred_check
          %p225 = pneg %p169
        $region34: #{tpu_custom_call.1} parent=11 // pred_check_branch
          %227 = sbr.rel (%p225) target = $region36
        $region35: #{tpu_custom_call.1} parent=11 // pred_region
          _
        $region36: #{tpu_custom_call.1} parent=11 // pred_fallthru
          _
      $region12: #{tpu_custom_call.1} parent=5 // pred_fallthru
        _
      %p228 = scmp.lt.s32.totalorder %s17, 2
      // Predicated region
      $region37: #{tpu_custom_call.1} parent=5 // pred_check
        %p229 = pneg %p228
      $region38: #{tpu_custom_call.1} parent=5 // pred_check_branch
        %231 = sbr.rel (%p229) target = $region40
      $region39: #{tpu_custom_call.1} parent=5 // pred_region
        // Predicated region
        $region41: #{tpu_custom_call.1} parent=39 // pred_check
          %p232 = pneg %p37
        $region42: #{tpu_custom_call.1} parent=39 // pred_check_branch
          %234 = sbr.rel (%p232) target = $region44
        $region43: #{tpu_custom_call.1} parent=39 // pred_region
          %s235 = smul.u32 32, %s17
          %p236 = scmp.lt.s32.totalorder %s235, 63
          %s237 = scalar_select %p236, %s235, 63
          %s238 = smul.addr %s237, 4
          %s239 = scalar_lea.vmem %s0, %s238
          %s240 = smul.u32 32, %s17
        $region44: #{tpu_custom_call.1} parent=39 // pred_fallthru
          _
      $region40: #{tpu_custom_call.1} parent=5 // pred_fallthru
        _
      %p241 = scmp.le.s32.totalorder 1, %s17
      %p242 = scmp.lt.s32.totalorder %s17, 3
      %p243 = pnand %p241, %p242
      %p244 = pneg %p243
      // Predicated region
      $region45: #{tpu_custom_call.1} parent=5 // pred_check
        _
      $region46: #{tpu_custom_call.1} parent=5 // pred_check_branch
        %246 = sbr.rel (%p243) target = $region48
      $region47: #{tpu_custom_call.1} parent=5 // pred_region
        %s247 = ssub.s32 %s17, 1
        %s248 = smul.u32 32, %s22
        %p249 = scmp.lt.s32.totalorder %s248, 63
        %s250 = scalar_select %p249, %s248, 63
        %s251 = smul.addr %s250, 4
        %s252 = scalar_lea.vmem %s0, %s251
        %p253 = pneg %p43
        %p254 = pneg %p40
        %p255 = pneg %p64
        %p256 = pneg %p61
        %p257 = pneg %p85
        %p258 = pneg %p82
        %p259 = pneg %p106
        %p260 = pneg %p103
        %p261 = pneg %p127
        %p262 = pneg %p124
        %p263 = pneg %p148
        %p264 = pneg %p145
        %p265 = pneg %p169
        %p266 = pneg %p166
        %p267 = pneg %p195
        %p268 = pneg %p192
        %s269 = sand.u32 %s182, 1
        %s270 = scalar_lea.sflag [#allocation4], %s269
        %s271 = sand.u32 %s182, 1
        %s272 = smul.addr %s271, 2
        %s273 = scalar_lea.vmem [#allocation3], %s272
        %s274 = smul.u32 32, %s22
        %p275 = scmp.lt.s32.totalorder %s274, 63
        %s276 = scalar_select %p275, %s274, 63
        %s277 = smul.addr %s276, 4
        %s278 = scalar_lea.vmem %s0, %s277
        %s279 = smul.u32 32, %s22
        %s280 = smul.u32 2, %s22
        %v282 = vld [vmem:[%s278] sm:$0xf]
        %v283 = vld [vmem:[%s278 + $0x4] sm:$0xf]
        %v284 = vld [vmem:[%s278 + $0x8] sm:$0xf]
        %v285 = vld [vmem:[%s278 + $0xc] sm:$0xf]
        %v286 = vld [vmem:[%s278 + $0x10] sm:$0xf]
        %v287 = vld [vmem:[%s278 + $0x14] sm:$0xf]
        %v288 = vld [vmem:[%s278 + $0x18] sm:$0xf]
        %v289 = vld [vmem:[%s278 + $0x1c] sm:$0xf]
        %v290 = vld [vmem:[%s278 + $0x20] sm:$0xf]
        %v291 = vld [vmem:[%s278 + $0x24] sm:$0xf]
        %v292 = vld [vmem:[%s278 + $0x28] sm:$0xf]
        %v293 = vld [vmem:[%s278 + $0x2c] sm:$0xf]
        %v294 = vld [vmem:[%s278 + $0x30] sm:$0xf]
        %v295 = vld [vmem:[%s278 + $0x34] sm:$0xf]
        %v296 = vld [vmem:[%s278 + $0x38] sm:$0xf]
        %v297 = vld [vmem:[%s278 + $0x3c] sm:$0xf]
        %v298 = vld [vmem:[%s278 + $0x40] sm:$0xf]
        %v299 = vld [vmem:[%s278 + $0x44] sm:$0xf]
        %v300 = vld [vmem:[%s278 + $0x48] sm:$0xf]
        %v301 = vld [vmem:[%s278 + $0x4c] sm:$0xf]
        %v302 = vld [vmem:[%s278 + $0x50] sm:$0xf]
        %v303 = vld [vmem:[%s278 + $0x54] sm:$0xf]
        %v304 = vld [vmem:[%s278 + $0x58] sm:$0xf]
        %v305 = vld [vmem:[%s278 + $0x5c] sm:$0xf]
        %v306 = vld [vmem:[%s278 + $0x60] sm:$0xf]
        %v307 = vld [vmem:[%s278 + $0x64] sm:$0xf]
        %v308 = vld [vmem:[%s278 + $0x68] sm:$0xf]
        %v309 = vld [vmem:[%s278 + $0x6c] sm:$0xf]
        %v310 = vld [vmem:[%s278 + $0x70] sm:$0xf]
        %v311 = vld [vmem:[%s278 + $0x74] sm:$0xf]
        %v312 = vld [vmem:[%s278 + $0x78] sm:$0xf]
        %v313 = vld [vmem:[%s278 + $0x7c] sm:$0xf]
        %v314 = vld [vmem:[%s1] sm:$0xf]
        %v315 = vld [vmem:[%s1 + $0x4] sm:$0xf]
        %v316 = vld [vmem:[%s1 + $0x8] sm:$0xf]
        %v317 = vld [vmem:[%s1 + $0xc] sm:$0xf]
        %v318 = vld [vmem:[%s2] sm:$0x1]
        %v320 = vlaneseq
        %v321 = vshrl.u32 %v320, 7
        %v322 = vsub.s32 0, %v321
        %v323 = vrot.slane %v318, %v322
        %v357 = vunpack.c.l.b16 %v282
        %v358 = vunpack.c.l.b16 %v283
        %v359 = vunpack.c.l.b16 %v284
        %v360 = vunpack.c.l.b16 %v285
        %v361 = vunpack.c.l.b16 %v286
        %v362 = vunpack.c.l.b16 %v287
        %v363 = vunpack.c.l.b16 %v288
        %v364 = vunpack.c.l.b16 %v289
        %v365 = vunpack.c.l.b16 %v290
        %v366 = vunpack.c.l.b16 %v291
        %v367 = vunpack.c.l.b16 %v292
        %v368 = vunpack.c.l.b16 %v293
        %v369 = vunpack.c.l.b16 %v294
        %v370 = vunpack.c.l.b16 %v295
        %v371 = vunpack.c.l.b16 %v296
        %v372 = vunpack.c.l.b16 %v297
        %v373 = vunpack.c.l.b16 %v298
        %v374 = vunpack.c.l.b16 %v299
        %v375 = vunpack.c.l.b16 %v300
        %v376 = vunpack.c.l.b16 %v301
        %v377 = vunpack.c.l.b16 %v302
        %v378 = vunpack.c.l.b16 %v303
        %v379 = vunpack.c.l.b16 %v304
        %v380 = vunpack.c.l.b16 %v305
        %v381 = vunpack.c.l.b16 %v306
        %v382 = vunpack.c.l.b16 %v307
        %v383 = vunpack.c.l.b16 %v308
        %v384 = vunpack.c.l.b16 %v309
        %v385 = vunpack.c.l.b16 %v310
        %v386 = vunpack.c.l.b16 %v311
        %v387 = vunpack.c.l.b16 %v312
        %v388 = vunpack.c.l.b16 %v313
        %v389 = vpack.c.b16 %v358, %v357
        %v390 = vpack.c.b16 %v360, %v359
        %v391 = vpack.c.b16 %v362, %v361
        %v392 = vpack.c.b16 %v364, %v363
        %v393 = vpack.c.b16 %v366, %v365
        %v394 = vpack.c.b16 %v368, %v367
        %v395 = vpack.c.b16 %v370, %v369
        %v396 = vpack.c.b16 %v372, %v371
        %v397 = vpack.c.b16 %v374, %v373
        %v398 = vpack.c.b16 %v376, %v375
        %v399 = vpack.c.b16 %v378, %v377
        %v400 = vpack.c.b16 %v380, %v379
        %v401 = vpack.c.b16 %v382, %v381
        %v402 = vpack.c.b16 %v384, %v383
        %v403 = vpack.c.b16 %v386, %v385
        %v404 = vpack.c.b16 %v388, %v387
        %v409 = vunpack.c.l.b16 %v314
        %v410 = vunpack.c.l.b16 %v315
        %v411 = vunpack.c.l.b16 %v316
        %v412 = vunpack.c.l.b16 %v317
        %v413 = vpack.c.b16 %v410, %v409
        %v414 = vpack.c.b16 %v412, %v411
        %vm417 = vcmask 261120
        %v419 = vsel %vm417, %v389, 0
        %v422 = vsel %vm417, %v390, 0
        %v425 = vsel %vm417, %v391, 0
        %v428 = vsel %vm417, %v392, 0
        %v431 = vsel %vm417, %v393, 0
        %v434 = vsel %vm417, %v394, 0
        %v437 = vsel %vm417, %v395, 0
        %v440 = vsel %vm417, %v396, 0
        %v443 = vsel %vm417, %v397, 0
        %v446 = vsel %vm417, %v398, 0
        %v449 = vsel %vm417, %v399, 0
        %v452 = vsel %vm417, %v400, 0
        %v455 = vsel %vm417, %v401, 0
        %v458 = vsel %vm417, %v402, 0
        %v461 = vsel %vm417, %v403, 0
        %v464 = vsel %vm417, %v404, 0
        %466 = vmatprep.subr.bf16.mxu0 0
        %467 = vmatpush1.bf16.msra.mxu0 %v413
        %468 = vmatprep.subr.bf16.mxu0 0
        %469 = vmatpush1.bf16.msra.mxu0 %v414
        %470 = vmatprep.subr.bf16.mxu0 0
        %471 = vmatpush1.bf16.msra.mxu0 0
        %472 = vmatprep.subr.bf16.mxu0 0
        %473 = vmatpush1.bf16.msra.mxu0 0
        %474 = vmatprep.subr.bf16.mxu0 0
        %475 = vmatpush1.bf16.msra.mxu0 0
        %476 = vmatprep.subr.bf16.mxu0 0
        %477 = vmatpush1.bf16.msra.mxu0 0
        %478 = vmatprep.subr.bf16.mxu0 0
        %479 = vmatpush1.bf16.msra.mxu0 0
        %480 = vmatprep.subr.bf16.mxu0 0
        %481 = vmatpush1.bf16.msra.mxu0 0
        %482 = vmatprep.subr.bf16.mxu0 0
        %483 = vmatpush1.bf16.msra.mxu0 0
        %484 = vmatprep.subr.bf16.mxu0 0
        %485 = vmatpush1.bf16.msra.mxu0 0
        %486 = vmatprep.subr.bf16.mxu0 0
        %487 = vmatpush1.bf16.msra.mxu0 0
        %488 = vmatprep.subr.bf16.mxu0 0
        %489 = vmatpush1.bf16.msra.mxu0 0
        %490 = vmatprep.subr.bf16.mxu0 0
        %491 = vmatpush1.bf16.msra.mxu0 0
        %492 = vmatprep.subr.bf16.mxu0 0
        %493 = vmatpush1.bf16.msra.mxu0 0
        %494 = vmatprep.subr.bf16.mxu0 0
        %495 = vmatpush1.bf16.msra.mxu0 0
        %496 = vmatprep.subr.bf16.mxu0 0
        %497 = vmatpush1.bf16.msra.mxu0 0
        %498 = vmatprep.mubr.bf16.mxu0 0
        %499 = vmatmul.mubr.bf16.gmra.mrb[0].mxu0 %v419
        %v500 = vpop.f32.mrb[0].mxu0
        %v501 = vadd.f32 %v323, %v500
        %v502 = vpop.f32.mrb[0].mxu0
        %v503 = vpop.f32.mrb[0].mxu0
        %v504 = vadd.f32 %v323, %v503
        %v505 = vpop.f32.mrb[0].mxu0
        %506 = vmatprep.mubr.bf16.mxu0 0
        %507 = vmatmul.mubr.bf16.gmra.mrb[0].mxu0 %v422
        %v508 = vpop.f32.mrb[0].mxu0
        %v509 = vadd.f32 %v323, %v508
        %v510 = vpop.f32.mrb[0].mxu0
        %v511 = vpop.f32.mrb[0].mxu0
        %v512 = vadd.f32 %v323, %v511
        %v513 = vpop.f32.mrb[0].mxu0
        %514 = vmatprep.mubr.bf16.mxu0 0
        %515 = vmatmul.mubr.bf16.gmra.mrb[0].mxu0 %v425
        %v516 = vpop.f32.mrb[0].mxu0
        %v517 = vadd.f32 %v323, %v516
        %v518 = vpop.f32.mrb[0].mxu0
        %v519 = vpop.f32.mrb[0].mxu0
        %v520 = vadd.f32 %v323, %v519
        %v521 = vpop.f32.mrb[0].mxu0
        %522 = vmatprep.mubr.bf16.mxu0 0
        %523 = vmatmul.mubr.bf16.gmra.mrb[0].mxu0 %v428
        %v524 = vpop.f32.mrb[0].mxu0
        %v525 = vadd.f32 %v323, %v524
        %v526 = vpop.f32.mrb[0].mxu0
        %v527 = vpop.f32.mrb[0].mxu0
        %v528 = vadd.f32 %v323, %v527
        %v529 = vpop.f32.mrb[0].mxu0
        %530 = vmatprep.mubr.bf16.mxu0 0
        %531 = vmatmul.mubr.bf16.gmra.mrb[0].mxu0 %v431
        %v532 = vpop.f32.mrb[0].mxu0
        %v533 = vadd.f32 %v323, %v532
        %v534 = vpop.f32.mrb[0].mxu0
        %v535 = vpop.f32.mrb[0].mxu0
        %v536 = vadd.f32 %v323, %v535
        %v537 = vpop.f32.mrb[0].mxu0
        %538 = vmatprep.mubr.bf16.mxu0 0
        %539 = vmatmul.mubr.bf16.gmra.mrb[0].mxu0 %v434
        %v540 = vpop.f32.mrb[0].mxu0
        %v541 = vadd.f32 %v323, %v540
        %v542 = vpop.f32.mrb[0].mxu0
        %v543 = vpop.f32.mrb[0].mxu0
        %v544 = vadd.f32 %v323, %v543
        %v545 = vpop.f32.mrb[0].mxu0
        %546 = vmatprep.mubr.bf16.mxu0 0
        %547 = vmatmul.mubr.bf16.gmra.mrb[0].mxu0 %v437
        %v548 = vpop.f32.mrb[0].mxu0
        %v549 = vadd.f32 %v323, %v548
        %v550 = vpop.f32.mrb[0].mxu0
        %v551 = vpop.f32.mrb[0].mxu0
        %v552 = vadd.f32 %v323, %v551
        %v553 = vpop.f32.mrb[0].mxu0
        %554 = vmatprep.mubr.bf16.mxu0 0
        %555 = vmatmul.mubr.bf16.gmra.mrb[0].mxu0 %v440
        %v556 = vpop.f32.mrb[0].mxu0
        %v557 = vadd.f32 %v323, %v556
        %v558 = vpop.f32.mrb[0].mxu0
        %v559 = vpop.f32.mrb[0].mxu0
        %v560 = vadd.f32 %v323, %v559
        %v561 = vpop.f32.mrb[0].mxu0
        %562 = vmatprep.mubr.bf16.mxu0 0
        %563 = vmatmul.mubr.bf16.gmra.mrb[0].mxu0 %v443
        %v564 = vpop.f32.mrb[0].mxu0
        %v565 = vadd.f32 %v323, %v564
        %v566 = vpop.f32.mrb[0].mxu0
        %v567 = vpop.f32.mrb[0].mxu0
        %v568 = vadd.f32 %v323, %v567
        %v569 = vpop.f32.mrb[0].mxu0
        %570 = vmatprep.mubr.bf16.mxu0 0
        %571 = vmatmul.mubr.bf16.gmra.mrb[0].mxu0 %v446
        %v572 = vpop.f32.mrb[0].mxu0
        %v573 = vadd.f32 %v323, %v572
        %v574 = vpop.f32.mrb[0].mxu0
        %v575 = vpop.f32.mrb[0].mxu0
        %v576 = vadd.f32 %v323, %v575
        %v577 = vpop.f32.mrb[0].mxu0
        %578 = vmatprep.mubr.bf16.mxu0 0
        %579 = vmatmul.mubr.bf16.gmra.mrb[0].mxu0 %v449
        %v580 = vpop.f32.mrb[0].mxu0
        %v581 = vadd.f32 %v323, %v580
        %v582 = vpop.f32.mrb[0].mxu0
        %v583 = vpop.f32.mrb[0].mxu0
        %v584 = vadd.f32 %v323, %v583
        %v585 = vpop.f32.mrb[0].mxu0
        %586 = vmatprep.mubr.bf16.mxu0 0
        %587 = vmatmul.mubr.bf16.gmra.mrb[0].mxu0 %v452
        %v588 = vpop.f32.mrb[0].mxu0
        %v589 = vadd.f32 %v323, %v588
        %v590 = vpop.f32.mrb[0].mxu0
        %v591 = vpop.f32.mrb[0].mxu0
        %v592 = vadd.f32 %v323, %v591
        %v593 = vpop.f32.mrb[0].mxu0
        %594 = vmatprep.mubr.bf16.mxu0 0
        %595 = vmatmul.mubr.bf16.gmra.mrb[0].mxu0 %v455
        %v596 = vpop.f32.mrb[0].mxu0
        %v597 = vadd.f32 %v323, %v596
        %v598 = vpop.f32.mrb[0].mxu0
        %v599 = vpop.f32.mrb[0].mxu0
        %v600 = vadd.f32 %v323, %v599
        %v601 = vpop.f32.mrb[0].mxu0
        %602 = vmatprep.mubr.bf16.mxu0 0
        %603 = vmatmul.mubr.bf16.gmra.mrb[0].mxu0 %v458
        %v604 = vpop.f32.mrb[0].mxu0
        %v605 = vadd.f32 %v323, %v604
        %v606 = vpop.f32.mrb[0].mxu0
        %v607 = vpop.f32.mrb[0].mxu0
        %v608 = vadd.f32 %v323, %v607
        %v609 = vpop.f32.mrb[0].mxu0
        %610 = vmatprep.mubr.bf16.mxu0 0
        %611 = vmatmul.mubr.bf16.gmra.mrb[0].mxu0 %v461
        %v612 = vpop.f32.mrb[0].mxu0
        %v613 = vadd.f32 %v323, %v612
        %v614 = vpop.f32.mrb[0].mxu0
        %v615 = vpop.f32.mrb[0].mxu0
        %v616 = vadd.f32 %v323, %v615
        %v617 = vpop.f32.mrb[0].mxu0
        %618 = vmatprep.mubr.bf16.mxu0 0
        %619 = vmatmul.mubr.bf16.gmra.mrb[0].mxu0 %v464
        %v620 = vpop.f32.mrb[0].mxu0
        %v621 = vadd.f32 %v323, %v620
        %v622 = vpop.f32.mrb[0].mxu0
        %v623 = vpop.f32.mrb[0].mxu0
        %v624 = vadd.f32 %v323, %v623
        %v625 = vpop.f32.mrb[0].mxu0
        %626 = vdwg.mxu0
        %v627 = vtanh.pop %v501
        %v628 = vtanh.pop %v504
        %v629 = vtanh.pop %v509
        %v630 = vtanh.pop %v512
        %v631 = vtanh.pop %v517
        %v632 = vtanh.pop %v520
        %v633 = vtanh.pop %v525
        %v634 = vtanh.pop %v528
        %v635 = vtanh.pop %v533
        %v636 = vtanh.pop %v536
        %v637 = vtanh.pop %v541
        %v638 = vtanh.pop %v544
        %v639 = vtanh.pop %v549
        %v640 = vtanh.pop %v552
        %v641 = vtanh.pop %v557
        %v642 = vtanh.pop %v560
        %v643 = vtanh.pop %v565
        %v644 = vtanh.pop %v568
        %v645 = vtanh.pop %v573
        %v646 = vtanh.pop %v576
        %v647 = vtanh.pop %v581
        %v648 = vtanh.pop %v584
        %v649 = vtanh.pop %v589
        %v650 = vtanh.pop %v592
        %v651 = vtanh.pop %v597
        %v652 = vtanh.pop %v600
        %v653 = vtanh.pop %v605
        %v654 = vtanh.pop %v608
        %v655 = vtanh.pop %v613
        %v656 = vtanh.pop %v616
        %v657 = vtanh.pop %v621
        %v658 = vtanh.pop %v624
        %v659 = vpack.c.bf16 %v628, %v627
        %v660 = vpack.c.bf16 %v630, %v629
        %v661 = vpack.c.bf16 %v632, %v631
        %v662 = vpack.c.bf16 %v634, %v633
        %v663 = vpack.c.bf16 %v636, %v635
        %v664 = vpack.c.bf16 %v638, %v637
        %v665 = vpack.c.bf16 %v640, %v639
        %v666 = vpack.c.bf16 %v642, %v641
        %v667 = vpack.c.bf16 %v644, %v643
        %v668 = vpack.c.bf16 %v646, %v645
        %v669 = vpack.c.bf16 %v648, %v647
        %v670 = vpack.c.bf16 %v650, %v649
        %v671 = vpack.c.bf16 %v652, %v651
        %v672 = vpack.c.bf16 %v654, %v653
        %v673 = vpack.c.bf16 %v656, %v655
        %v674 = vpack.c.bf16 %v658, %v657
        %v675 = vld [vmem:[%s3] sm:$0xf]
        %v676 = vld [vmem:[%s3 + $0x4] sm:$0xf]
        %v677 = vld [vmem:[%s3 + $0x8] sm:$0xf]
        %v678 = vld [vmem:[%s3 + $0xc] sm:$0xf]
        %v679 = vld [vmem:[%s3 + $0x10] sm:$0xf]
        %v680 = vld [vmem:[%s3 + $0x14] sm:$0xf]
        %v681 = vld [vmem:[%s3 + $0x18] sm:$0xf]
        %v682 = vld [vmem:[%s3 + $0x1c] sm:$0xf]
        %v683 = vld [vmem:[%s3 + $0x20] sm:$0xf]
        %v684 = vld [vmem:[%s3 + $0x24] sm:$0xf]
        %v685 = vld [vmem:[%s3 + $0x28] sm:$0xf]
        %v686 = vld [vmem:[%s3 + $0x2c] sm:$0xf]
        %v687 = vld [vmem:[%s3 + $0x30] sm:$0xf]
        %v688 = vld [vmem:[%s3 + $0x34] sm:$0xf]
        %v689 = vld [vmem:[%s3 + $0x38] sm:$0xf]
        %v690 = vld [vmem:[%s3 + $0x3c] sm:$0xf]
        %v691 = vld [vmem:[%s4] sm:$0x1]
        %v693 = vlaneseq
        %v694 = vshrl.u32 %v693, 7
        %v695 = vsub.s32 0, %v694
        %v696 = vrot.slane %v691, %v695
        %v714 = vunpack.c.l.b16 %v675
        %v715 = vunpack.c.l.b16 %v676
        %v716 = vunpack.c.l.b16 %v677
        %v717 = vunpack.c.l.b16 %v678
        %v718 = vunpack.c.l.b16 %v679
        %v719 = vunpack.c.l.b16 %v680
        %v720 = vunpack.c.l.b16 %v681
        %v721 = vunpack.c.l.b16 %v682
        %v722 = vunpack.c.l.b16 %v683
        %v723 = vunpack.c.l.b16 %v684
        %v724 = vunpack.c.l.b16 %v685
        %v725 = vunpack.c.l.b16 %v686
        %v726 = vunpack.c.l.b16 %v687
        %v727 = vunpack.c.l.b16 %v688
        %v728 = vunpack.c.l.b16 %v689
        %v729 = vunpack.c.l.b16 %v690
        %v730 = vpack.c.b16 %v715, %v714
        %v731 = vpack.c.b16 %v717, %v716
        %v732 = vpack.c.b16 %v719, %v718
        %v733 = vpack.c.b16 %v721, %v720
        %v734 = vpack.c.b16 %v723, %v722
        %v735 = vpack.c.b16 %v725, %v724
        %v736 = vpack.c.b16 %v727, %v726
        %v737 = vpack.c.b16 %v729, %v728
        %746 = vmatprep.subr.bf16.mxu0 0
        %747 = vmatpush1.bf16.msra.mxu0 %v730
        %748 = vmatprep.subr.bf16.mxu0 0
        %749 = vmatpush1.bf16.msra.mxu0 %v731
        %750 = vmatprep.subr.bf16.mxu0 0
        %751 = vmatpush1.bf16.msra.mxu0 %v732
        %752 = vmatprep.subr.bf16.mxu0 0
        %753 = vmatpush1.bf16.msra.mxu0 %v733
        %754 = vmatprep.subr.bf16.mxu0 0
        %755 = vmatpush1.bf16.msra.mxu0 %v734
        %756 = vmatprep.subr.bf16.mxu0 0
        %757 = vmatpush1.bf16.msra.mxu0 %v735
        %758 = vmatprep.subr.bf16.mxu0 0
        %759 = vmatpush1.bf16.msra.mxu0 %v736
        %760 = vmatprep.subr.bf16.mxu0 0
        %761 = vmatpush1.bf16.msra.mxu0 %v737
        %762 = vmatprep.subr.bf16.mxu0 0
        %763 = vmatpush1.bf16.msra.mxu0 0
        %764 = vmatprep.subr.bf16.mxu0 0
        %765 = vmatpush1.bf16.msra.mxu0 0
        %766 = vmatprep.subr.bf16.mxu0 0
        %767 = vmatpush1.bf16.msra.mxu0 0
        %768 = vmatprep.subr.bf16.mxu0 0
        %769 = vmatpush1.bf16.msra.mxu0 0
        %770 = vmatprep.subr.bf16.mxu0 0
        %771 = vmatpush1.bf16.msra.mxu0 0
        %772 = vmatprep.subr.bf16.mxu0 0
        %773 = vmatpush1.bf16.msra.mxu0 0
        %774 = vmatprep.subr.bf16.mxu0 0
        %775 = vmatpush1.bf16.msra.mxu0 0
        %776 = vmatprep.subr.bf16.mxu0 0
        %777 = vmatpush1.bf16.msra.mxu0 0
        %778 = vmatprep.mubr.bf16.mxu0 0
        %779 = vmatmul.mubr.bf16.gmra.mrb[0].mxu0 %v659
        %v780 = vpop.f32.mrb[0].mxu0
        %v781 = vadd.f32 %v696, %v780
        %v782 = vpop.f32.mrb[0].mxu0
        %v783 = vpop.f32.mrb[0].mxu0
        %v784 = vadd.f32 %v696, %v783
        %v785 = vpop.f32.mrb[0].mxu0
        %786 = vmatprep.mubr.bf16.mxu0 0
        %787 = vmatmul.mubr.bf16.gmra.mrb[0].mxu0 %v660
        %v788 = vpop.f32.mrb[0].mxu0
        %v789 = vadd.f32 %v696, %v788
        %v790 = vpop.f32.mrb[0].mxu0
        %v791 = vpop.f32.mrb[0].mxu0
        %v792 = vadd.f32 %v696, %v791
        %v793 = vpop.f32.mrb[0].mxu0
        %794 = vmatprep.mubr.bf16.mxu0 0
        %795 = vmatmul.mubr.bf16.gmra.mrb[0].mxu0 %v661
        %v796 = vpop.f32.mrb[0].mxu0
        %v797 = vadd.f32 %v696, %v796
        %v798 = vpop.f32.mrb[0].mxu0
        %v799 = vpop.f32.mrb[0].mxu0
        %v800 = vadd.f32 %v696, %v799
        %v801 = vpop.f32.mrb[0].mxu0
        %802 = vmatprep.mubr.bf16.mxu0 0
        %803 = vmatmul.mubr.bf16.gmra.mrb[0].mxu0 %v662
        %v804 = vpop.f32.mrb[0].mxu0
        %v805 = vadd.f32 %v696, %v804
        %v806 = vpop.f32.mrb[0].mxu0
        %v807 = vpop.f32.mrb[0].mxu0
        %v808 = vadd.f32 %v696, %v807
        %v809 = vpop.f32.mrb[0].mxu0
        %810 = vmatprep.mubr.bf16.mxu0 0
        %811 = vmatmul.mubr.bf16.gmra.mrb[0].mxu0 %v663
        %v812 = vpop.f32.mrb[0].mxu0
        %v813 = vadd.f32 %v696, %v812
        %v814 = vpop.f32.mrb[0].mxu0
        %v815 = vpop.f32.mrb[0].mxu0
        %v816 = vadd.f32 %v696, %v815
        %v817 = vpop.f32.mrb[0].mxu0
        %818 = vmatprep.mubr.bf16.mxu0 0
        %819 = vmatmul.mubr.bf16.gmra.mrb[0].mxu0 %v664
        %v820 = vpop.f32.mrb[0].mxu0
        %v821 = vadd.f32 %v696, %v820
        %v822 = vpop.f32.mrb[0].mxu0
        %v823 = vpop.f32.mrb[0].mxu0
        %v824 = vadd.f32 %v696, %v823
        %v825 = vpop.f32.mrb[0].mxu0
        %826 = vmatprep.mubr.bf16.mxu0 0
        %827 = vmatmul.mubr.bf16.gmra.mrb[0].mxu0 %v665
        %v828 = vpop.f32.mrb[0].mxu0
        %v829 = vadd.f32 %v696, %v828
        %v830 = vpop.f32.mrb[0].mxu0
        %v831 = vpop.f32.mrb[0].mxu0
        %v832 = vadd.f32 %v696, %v831
        %v833 = vpop.f32.mrb[0].mxu0
        %834 = vmatprep.mubr.bf16.mxu0 0
        %835 = vmatmul.mubr.bf16.gmra.mrb[0].mxu0 %v666
        %v836 = vpop.f32.mrb[0].mxu0
        %v837 = vadd.f32 %v696, %v836
        %v838 = vpop.f32.mrb[0].mxu0
        %v839 = vpop.f32.mrb[0].mxu0
        %v840 = vadd.f32 %v696, %v839
        %v841 = vpop.f32.mrb[0].mxu0
        %842 = vmatprep.mubr.bf16.mxu0 0
        %843 = vmatmul.mubr.bf16.gmra.mrb[0].mxu0 %v667
        %v844 = vpop.f32.mrb[0].mxu0
        %v845 = vadd.f32 %v696, %v844
        %v846 = vpop.f32.mrb[0].mxu0
        %v847 = vpop.f32.mrb[0].mxu0
        %v848 = vadd.f32 %v696, %v847
        %v849 = vpop.f32.mrb[0].mxu0
        %850 = vmatprep.mubr.bf16.mxu0 0
        %851 = vmatmul.mubr.bf16.gmra.mrb[0].mxu0 %v668
        %v852 = vpop.f32.mrb[0].mxu0
        %v853 = vadd.f32 %v696, %v852
        %v854 = vpop.f32.mrb[0].mxu0
        %v855 = vpop.f32.mrb[0].mxu0
        %v856 = vadd.f32 %v696, %v855
        %v857 = vpop.f32.mrb[0].mxu0
        %858 = vmatprep.mubr.bf16.mxu0 0
        %859 = vmatmul.mubr.bf16.gmra.mrb[0].mxu0 %v669
        %v860 = vpop.f32.mrb[0].mxu0
        %v861 = vadd.f32 %v696, %v860
        %v862 = vpop.f32.mrb[0].mxu0
        %v863 = vpop.f32.mrb[0].mxu0
        %v864 = vadd.f32 %v696, %v863
        %v865 = vpop.f32.mrb[0].mxu0
        %866 = vmatprep.mubr.bf16.mxu0 0
        %867 = vmatmul.mubr.bf16.gmra.mrb[0].mxu0 %v670
        %v868 = vpop.f32.mrb[0].mxu0
        %v869 = vadd.f32 %v696, %v868
        %v870 = vpop.f32.mrb[0].mxu0
        %v871 = vpop.f32.mrb[0].mxu0
        %v872 = vadd.f32 %v696, %v871
        %v873 = vpop.f32.mrb[0].mxu0
        %874 = vmatprep.mubr.bf16.mxu0 0
        %875 = vmatmul.mubr.bf16.gmra.mrb[0].mxu0 %v671
        %v876 = vpop.f32.mrb[0].mxu0
        %v877 = vadd.f32 %v696, %v876
        %v878 = vpop.f32.mrb[0].mxu0
        %v879 = vpop.f32.mrb[0].mxu0
        %v880 = vadd.f32 %v696, %v879
        %v881 = vpop.f32.mrb[0].mxu0
        %882 = vmatprep.mubr.bf16.mxu0 0
        %883 = vmatmul.mubr.bf16.gmra.mrb[0].mxu0 %v672
        %v884 = vpop.f32.mrb[0].mxu0
        %v885 = vadd.f32 %v696, %v884
        %v886 = vpop.f32.mrb[0].mxu0
        %v887 = vpop.f32.mrb[0].mxu0
        %v888 = vadd.f32 %v696, %v887
        %v889 = vpop.f32.mrb[0].mxu0
        %890 = vmatprep.mubr.bf16.mxu0 0
        %891 = vmatmul.mubr.bf16.gmra.mrb[0].mxu0 %v673
        %v892 = vpop.f32.mrb[0].mxu0
        %v893 = vadd.f32 %v696, %v892
        %v894 = vpop.f32.mrb[0].mxu0
        %v895 = vpop.f32.mrb[0].mxu0
        %v896 = vadd.f32 %v696, %v895
        %v897 = vpop.f32.mrb[0].mxu0
        %898 = vmatprep.mubr.bf16.mxu0 0
        %899 = vmatmul.mubr.bf16.gmra.mrb[0].mxu0 %v674
        %v900 = vpop.f32.mrb[0].mxu0
        %v901 = vadd.f32 %v696, %v900
        %v902 = vpop.f32.mrb[0].mxu0
        %v903 = vpop.f32.mrb[0].mxu0
        %v904 = vadd.f32 %v696, %v903
        %v905 = vpop.f32.mrb[0].mxu0
        %906 = vdwg.mxu0
        %v907 = vtanh.pop %v781
        %v908 = vtanh.pop %v784
        %v909 = vtanh.pop %v789
        %v910 = vtanh.pop %v792
        %v911 = vtanh.pop %v797
        %v912 = vtanh.pop %v800
        %v913 = vtanh.pop %v805
        %v914 = vtanh.pop %v808
        %v915 = vtanh.pop %v813
        %v916 = vtanh.pop %v816
        %v917 = vtanh.pop %v821
        %v918 = vtanh.pop %v824
        %v919 = vtanh.pop %v829
        %v920 = vtanh.pop %v832
        %v921 = vtanh.pop %v837
        %v922 = vtanh.pop %v840
        %v923 = vtanh.pop %v845
        %v924 = vtanh.pop %v848
        %v925 = vtanh.pop %v853
        %v926 = vtanh.pop %v856
        %v927 = vtanh.pop %v861
        %v928 = vtanh.pop %v864
        %v929 = vtanh.pop %v869
        %v930 = vtanh.pop %v872
        %v931 = vtanh.pop %v877
        %v932 = vtanh.pop %v880
        %v933 = vtanh.pop %v885
        %v934 = vtanh.pop %v888
        %v935 = vtanh.pop %v893
        %v936 = vtanh.pop %v896
        %v937 = vtanh.pop %v901
        %v938 = vtanh.pop %v904
        %v939 = vpack.c.bf16 %v908, %v907
        %v940 = vpack.c.bf16 %v910, %v909
        %v941 = vpack.c.bf16 %v912, %v911
        %v942 = vpack.c.bf16 %v914, %v913
        %v943 = vpack.c.bf16 %v916, %v915
        %v944 = vpack.c.bf16 %v918, %v917
        %v945 = vpack.c.bf16 %v920, %v919
        %v946 = vpack.c.bf16 %v922, %v921
        %v947 = vpack.c.bf16 %v924, %v923
        %v948 = vpack.c.bf16 %v926, %v925
        %v949 = vpack.c.bf16 %v928, %v927
        %v950 = vpack.c.bf16 %v930, %v929
        %v951 = vpack.c.bf16 %v932, %v931
        %v952 = vpack.c.bf16 %v934, %v933
        %v953 = vpack.c.bf16 %v936, %v935
        %v954 = vpack.c.bf16 %v938, %v937
        %v955 = vld [vmem:[%s5] sm:$0x1]
        %s956 = sld [smem:[#allocation2]]
        %v957 = vstv %s956
        %958 = vmatprep.subr.bf16.mxu0 0
        %959 = vmatpush1.bf16.xpose.msra.mxu0 %v939
        %960 = vmatprep.subr.bf16.mxu0 0
        %961 = vmatpush1.bf16.xpose.msra.mxu0 %v940
        %962 = vmatprep.subr.bf16.mxu0 0
        %963 = vmatpush1.bf16.xpose.msra.mxu0 %v941
        %964 = vmatprep.subr.bf16.mxu0 0
        %965 = vmatpush1.bf16.xpose.msra.mxu0 %v942
        %966 = vmatprep.subr.bf16.mxu0 0
        %967 = vmatpush1.bf16.xpose.msra.mxu0 %v943
        %968 = vmatprep.subr.bf16.mxu0 0
        %969 = vmatpush1.bf16.xpose.msra.mxu0 %v944
        %970 = vmatprep.subr.bf16.mxu0 0
        %971 = vmatpush1.bf16.xpose.msra.mxu0 %v945
        %972 = vmatprep.subr.bf16.mxu0 0
        %973 = vmatpush1.bf16.xpose.msra.mxu0 %v946
        %974 = vmatprep.subr.bf16.mxu0 0
        %975 = vmatpush1.bf16.xpose.msra.mxu0 %v947
        %976 = vmatprep.subr.bf16.mxu0 0
        %977 = vmatpush1.bf16.xpose.msra.mxu0 %v948
        %978 = vmatprep.subr.bf16.mxu0 0
        %979 = vmatpush1.bf16.xpose.msra.mxu0 %v949
        %980 = vmatprep.subr.bf16.mxu0 0
        %981 = vmatpush1.bf16.xpose.msra.mxu0 %v950
        %982 = vmatprep.subr.bf16.mxu0 0
        %983 = vmatpush1.bf16.xpose.msra.mxu0 %v951
        %984 = vmatprep.subr.bf16.mxu0 0
        %985 = vmatpush1.bf16.xpose.msra.mxu0 %v952
        %986 = vmatprep.subr.bf16.mxu0 0
        %987 = vmatpush1.bf16.xpose.msra.mxu0 %v953
        %988 = vmatprep.subr.bf16.mxu0 0
        %989 = vmatpush1.bf16.xpose.msra.mxu0 %v954
        %990 = vmatprep.mubr.bf16.mxu0 0
        %991 = vmatmul.mubr.bf16.gmra.mrb[0].mxu0 %v955
        %v992 = vpop.f32.mrb[0].mxu0
        %v993 = vadd.f32 %v957, %v992
        %v994 = vpop.f32.mrb[0].mxu0
        %v995 = vadd.f32 %v957, %v994
        %v996 = vpop.f32.mrb[0].mxu0
        %v997 = vpop.f32.mrb[0].mxu0
        %998 = vdwg.mxu0
        %v1001 = vcombine.low %v993, %v995
        %v1003 = vunpack.c.l.s4 1966171168
        %v1004 = vunpack.c.0.s8 %v1003
        %v1005 = vlaneseq
        %v1006 = vshrl.u32 %v1005, 7
        %v1007 = vsub.s32 %v1004, %v1006
        %v1008 = vrot.slane %v1001, %v1007
        %v1010 = vunpack.c.l.s4 1966171168
        %v1011 = vunpack.c.0.s8 %v1010
        %v1012 = vlaneseq
        %v1013 = vshrl.u32 %v1012, 7
        %v1014 = vsub.s32 %v1011, %v1013
        %v1015 = vrot.slane %v1008, %v1014
        %v1017 = vlaneseq
        %vm1018 = vcmp.ge.s32.totalorder %v1017, 0
        %vm1019 = vcmp.lt.s32.totalorder %v1017, 256
        %vm1020 = vmand %vm1018, %vm1019
        %1021 = vst.msk [vmem:[%s273] sm:$0x3] %vm1020, %v1015
        %s1022 = sand.u32 %s182, 1
        %s1023 = scalar_lea.sflag [#allocation4], %s1022
        %s1024 = sand.u32 %s182, 1
        %s1025 = smul.addr %s1024, 2
        %s1026 = scalar_lea.vmem [#allocation3], %s1025
        // Predicated region
        $region49: #{tpu_custom_call.1} parent=47 // pred_check
          %p1027 = pneg %p192
        $region50: #{tpu_custom_call.1} parent=47 // pred_check_branch
          %1029 = sbr.rel (%p1027) target = $region52
        $region51: #{tpu_custom_call.1} parent=47 // pred_region
          %s1030 = smul.u32 2, %s22
          %s1032 = ssub.s32 32, 32
          %1033 = vsyncadd %s1023, %s1032
          %s1034 = smul.addr %s1030, 16
          %s1035 = scalar_lea.hbm %s7, %s1034
          %s1037 = sshll.u32 %s1026, 4
          %s1038 = int_to_ptr.vmem [resolvable:$true] %s1037
          %1040 = dma.vmem_to_hbm [thread:$0]  %s1038, 32, %s1035, %s1023
        $region52: #{tpu_custom_call.1} parent=47 // pred_fallthru
          _
      $region48: #{tpu_custom_call.1} parent=5 // pred_fallthru
        _
      %p1041 = scmp.le.s32.totalorder 2, %s17
      // Predicated region
      $region53: #{tpu_custom_call.1} parent=5 // pred_check
        %p1042 = pneg %p1041
      $region54: #{tpu_custom_call.1} parent=5 // pred_check_branch
        %1044 = sbr.rel (%p1042) target = $region56
      $region55: #{tpu_custom_call.1} parent=5 // pred_region
        %s1045 = ssub.s32 %s17, 2
        // Predicated region
        $region57: #{tpu_custom_call.1} parent=55 // pred_check
          %p1046 = pneg %p198
        $region58: #{tpu_custom_call.1} parent=55 // pred_check_branch
          %1048 = sbr.rel (%p1046) target = $region60
        $region59: #{tpu_custom_call.1} parent=55 // pred_region
          %s1049 = sand.u32 %s183, 1
          %s1050 = scalar_lea.sflag [#allocation4], %s1049
          %s1051 = sand.u32 %s183, 1
          %s1052 = smul.addr %s1051, 2
          %s1053 = scalar_lea.vmem [#allocation3], %s1052
          %1054 = dma.done %s1050, 32
        $region60: #{tpu_custom_call.1} parent=55 // pred_fallthru
          _
      $region56: #{tpu_custom_call.1} parent=5 // pred_fallthru
        _
    $region6: #{tpu_custom_call.1} parent=1 // loop_footer
      %s21 = sadd.s32 1, %s17
    $region7: #{tpu_custom_call.1} parent=1 // loop_footer_branch
      %16 = sbr.rel target = $region3
    $region8: #{tpu_custom_call.1} parent=1 // loop_exit
      _
    %1055 = vsyncpa [#allocation4], 1
    %s1056 = scalar_lea.sflag [#allocation4], 1
    %1057 = vsyncpa %s1056, 1

</llo_original>
